<compile_context>
chip_gen: v7x
topology: tpu7x:2x2x1
jax: 0.10.0
libtpu: 0.0.40
codegen_flags: <defaults>
</compile_context>

<pallas_src>
import jax
import jax.numpy as jnp
from jax.experimental import pallas as pl
from jax.experimental.pallas import tpu as pltpu

_LANE = 1024           # lane-dense last dim (multiple of 128 -> unmasked wide stores)
_MAX_TILE_ROWS = 512   # (512, 1024) f32 tile = 2 MiB; ~4x with double-buffered in+out
_MIN_PALLAS_BYTES = 1 << 20  # below ~1 MiB, pallas_call fixed overhead dominates


def _scale_kernel(scale_ref, x_ref, o_ref):
    # scale_ref: full (1,) f32 array resident in SMEM (same for every tile)
    # x_ref / o_ref: (TILE_ROWS, _LANE) VMEM tiles, auto double-buffered by Pallas
    o_ref[...] = (scale_ref[0] * x_ref[...]).astype(o_ref.dtype)


def _round_up(n, m):
    return ((n + m - 1) // m) * m


def random_scale_1d(x, key, *, min_pallas_bytes=_MIN_PALLAS_BYTES):
    """Scale every element of x by a single N(0,1) random scalar."""
    scale = jax.random.normal(key, (1,), dtype=jnp.float32)

    nbytes = x.size * x.dtype.itemsize
    if nbytes < min_pallas_bytes:
        # Tiny input: let XLA fuse the scalar multiply; kernel/DMA setup would dominate.
        return (scale[0] * x).astype(x.dtype), scale

    orig_shape = x.shape
    n = x.size
    flat = x.reshape(-1)  # contiguous reshape: free

    # Lane-dense 2-D slab with last dim = 1024; pad rows to a (8,128)-legal tile.
    n_rows = pl.cdiv(n, _LANE)
    tile_rows = _MAX_TILE_ROWS if n_rows >= _MAX_TILE_ROWS else _round_up(n_rows, 32)
    padded_rows = _round_up(n_rows, tile_rows)
    padded_n = padded_rows * _LANE
    if padded_n != n:
        flat = jnp.pad(flat, (0, padded_n - n))
    x2d = flat.reshape(padded_rows, _LANE)

    grid = (padded_rows // tile_rows,)

    out2d = pl.pallas_call(
        _scale_kernel,
        out_shape=jax.ShapeDtypeStruct(x2d.shape, x.dtype),
        grid=grid,
        in_specs=[
            pl.BlockSpec(memory_space=pltpu.SMEM),                 # the random scalar
            pl.BlockSpec((tile_rows, _LANE), lambda i: (i, 0)),    # pipelined input tiles
        ],
        out_specs=pl.BlockSpec((tile_rows, _LANE), lambda i: (i, 0)),
        compiler_params=pltpu.CompilerParams(
            dimension_semantics=("parallel",),  # independent tiles: shard across TCs (v7x)
        ),
    )(scale, x2d)

    out = out2d.reshape(-1)
    if padded_n != n:
        out = out[:n]
    return out.reshape(orig_shape), scale


if __name__ == "__main__":
    key = jax.random.PRNGKey(0)
    k_small, k_big, k_scale = jax.random.split(key, 3)

    # 1) Tiny input (2, 4, 128) = 4 KiB: hits the plain-JAX bypass path.
    x_small = jax.random.normal(k_small, (2, 4, 128), dtype=jnp.float32)
    out_s, scale_s = random_scale_1d(x_small, k_scale)
    out_s = jax.block_until_ready(out_s)
    assert out_s.shape == x_small.shape and out_s.dtype == x_small.dtype
    assert jnp.allclose(out_s, scale_s[0] * x_small, atol=1e-6, rtol=1e-6)

    # 2) Same tiny input forced through the Pallas kernel
    #    (exercises pad -> single (32, 1024) tile -> unpad).
    out_f, scale_f = random_scale_1d(x_small, k_scale, min_pallas_bytes=0)
    out_f = jax.block_until_ready(out_f)
    assert out_f.shape == x_small.shape and out_f.dtype == x_small.dtype
    assert jnp.allclose(out_f, scale_f[0] * x_small, atol=1e-6, rtol=1e-6)

    # 3) Larger input (8, 16, 8192) = 4 MiB: multi-tile pipelined kernel path
    #    ((1024, 1024) slab -> grid=(2,) of (512, 1024) tiles).
    x_big = jax.random.normal(k_big, (8, 16, 8192), dtype=jnp.float32)
    out_b, scale_b = random_scale_1d(x_big, k_scale)
    out_b = jax.block_until_ready(out_b)
    assert out_b.shape == x_big.shape and out_b.dtype == x_big.dtype
    assert jnp.allclose(out_b, scale_b[0] * x_big, atol=1e-6, rtol=1e-6)

    print("KERNEL_OK")
</pallas_src>

<mosaic_0001>
module attributes {stable_mosaic.version = 11 : i64} {
  func.func @_scale_kernel(%arg0: i32, %arg1: memref<1xf32, #tpu.memory_space<smem>>, %arg2: memref<32x1024xf32, #tpu.memory_space<vmem>>, %arg3: memref<32x1024xf32, #tpu.memory_space<vmem>>) attributes {dimension_semantics = [#tpu.dimension_semantics<parallel>], iteration_bounds = array<i64: 1>, scalar_prefetch = 0 : i64, scratch_operands = 0 : i64, tpu.core_type = #tpu.core_type<tc>, window_params = [{transform_indices = @transform_0, window_bounds = array<i64: 1>}, {transform_indices = @transform_1, window_bounds = array<i64: 32, 1024>}, {transform_indices = @transform_2, window_bounds = array<i64: 32, 1024>}]} {
    %c0 = arith.constant 0 : index
    %0 = memref.load %arg1[%c0] : memref<1xf32, #tpu.memory_space<smem>>
    %c0_0 = arith.constant 0 : index
    %c0_1 = arith.constant 0 : index
    %1 = vector.load %arg2[%c0_0, %c0_1] : memref<32x1024xf32, #tpu.memory_space<vmem>>, vector<32x1024xf32>
    %2 = vector.broadcast %0 : f32 to vector<32x1024xf32>
    %3 = arith.mulf %2, %1 : vector<32x1024xf32>
    %c0_2 = arith.constant 0 : index
    %c0_3 = arith.constant 0 : index
    %4 = vector.load %arg3[%c0_2, %c0_3] : memref<32x1024xf32, #tpu.memory_space<vmem>>, vector<32x1024xf32>
    tpu.vector_store %arg3[%c0_2, %c0_3], %3 {strides = array<i32>} : memref<32x1024xf32, #tpu.memory_space<vmem>>, vector<32x1024xf32>,
    return
  }
  func.func @transform_0(%arg0: i32) -> i32 {
    %c0_i32 = arith.constant 0 : i32
    %c0_i32_0 = arith.constant 0 : i32
    return %c0_i32 : i32
  }
  func.func @transform_1(%arg0: i32) -> (i32, i32) {
    %c0_i32 = arith.constant 0 : i32
    %c0_i32_0 = arith.constant 0 : i32
    return %arg0, %c0_i32 : i32, i32
  }
  func.func @transform_2(%arg0: i32) -> (i32, i32) {
    %c0_i32 = arith.constant 0 : i32
    %c0_i32_0 = arith.constant 0 : i32
    return %arg0, %c0_i32 : i32, i32
  }
}

</mosaic_0001>

<llo_original>
// kernel: tpu_custom_call.1
$region0: #{tpu_custom_call.1}
  #allocation0 [shape = 'u32[]', space=smem, size = 0x4, offset = 0x4, fixed_abs, tag = 'smem constant byte address 0x4 - core index']
  #allocation1 [shape = 'u32[144,128]{1,0:T(1,128)}', space=vmem, size = 0x12000, scoped, tag = 'internal scratch']
  #allocation2 [shape = 'f32[1]{0:T(128)S(6)}', space=smem, size = 0x200, scoped, tag = 'scoped memory for tpu_custom_call.1']
  %s0 = inlined_call_operand.<no memory space> [shape: f32[1], index: 0, kind: input, shape index: {}]
  %s1 = inlined_call_operand.hbm [shape: f32[32,1024], index: 1, kind: input, shape index: {}]
  %s2 = inlined_call_operand.hbm [shape: f32[32,1024], index: 2, kind: output, shape index: {}]
  %s3 = sld [smem:[#allocation0]]
  $region22: #{tpu_custom_call.1} parent=0
    _
  %s5 = ssub.s32 1, %s3
  %s6 = scalar_select 0, %s5, %s3
  %7 = sst [smem:[#allocation2]] %s0
  $region1: #{tpu_custom_call.1} parent=0
    #allocation3 [shape = 'u8[131072]{0}', space=vmem, size = 0x20000, scoped, tag = 'input window, operand 1, single buffered']
    #allocation4 [shape = 's32[1]{0}', space=sflag, size = 0x4, scoped, tag = 'scoped memory for tpu_custom_call.1']
    #allocation5 [shape = 's32[1]{0}', space=sflag, size = 0x4, scoped, tag = 'scoped memory for tpu_custom_call.1']
    #allocation6 [shape = 'u8[131072]{0}', space=vmem, size = 0x20000, scoped, tag = 'output window, operand 0, single buffered']
    %8 = vsyncpa [#allocation4], 0
    %9 = vsyncpa [#allocation5], 0
    // Predicated region
    $region2: #{tpu_custom_call.1} parent=1 // pred_check
      _
    $region3: #{tpu_custom_call.1} parent=1 // pred_check_branch
      %11 = sbr.rel (0) target = $region5
    $region4: #{tpu_custom_call.1} parent=1 // pred_region
      _
    $region5: #{tpu_custom_call.1} parent=1 // pred_fallthru
      _
    // Predicated region
    $region6: #{tpu_custom_call.1} parent=1 // pred_check
      _
    $region7: #{tpu_custom_call.1} parent=1 // pred_check_branch
      %13 = sbr.rel (0) target = $region9
    $region8: #{tpu_custom_call.1} parent=1 // pred_region
      %s15 = ssub.s32 4096, 4096
      %16 = vsyncadd [#allocation4], %s15
      %s17 = sshll.u32 [#allocation3], 4
      %s18 = int_to_ptr.vmem [resolvable:$true] %s17
      %23 = dma.hbm_to_vmem [thread:$0]  %s1, 4096, %s18, [#allocation4], 1024, 1024, 64
    $region9: #{tpu_custom_call.1} parent=1 // pred_fallthru
      _
    // Predicated region
    $region10: #{tpu_custom_call.1} parent=1 // pred_check
      _
    $region11: #{tpu_custom_call.1} parent=1 // pred_check_branch
      %25 = sbr.rel (0) target = $region13
    $region12: #{tpu_custom_call.1} parent=1 // pred_region
      %26 = dma.done [#allocation4], 4096
    $region13: #{tpu_custom_call.1} parent=1 // pred_fallthru
      _
    %s27 = sld [smem:[#allocation2]]
    %v28 = vld [vmem:[#allocation3] sm:$0xff]
    %v29 = vld [vmem:[#allocation3 + $0x8] sm:$0xff]
    %v30 = vld [vmem:[#allocation3 + $0x10] sm:$0xff]
    %v31 = vld [vmem:[#allocation3 + $0x18] sm:$0xff]
    %v32 = vld [vmem:[#allocation3 + $0x20] sm:$0xff]
    %v33 = vld [vmem:[#allocation3 + $0x28] sm:$0xff]
    %v34 = vld [vmem:[#allocation3 + $0x30] sm:$0xff]
    %v35 = vld [vmem:[#allocation3 + $0x38] sm:$0xff]
    %v36 = vld [vmem:[#allocation3 + $0x40] sm:$0xff]
    %v37 = vld [vmem:[#allocation3 + $0x48] sm:$0xff]
    %v38 = vld [vmem:[#allocation3 + $0x50] sm:$0xff]
    %v39 = vld [vmem:[#allocation3 + $0x58] sm:$0xff]
    %v40 = vld [vmem:[#allocation3 + $0x60] sm:$0xff]
    %v41 = vld [vmem:[#allocation3 + $0x68] sm:$0xff]
    %v42 = vld [vmem:[#allocation3 + $0x70] sm:$0xff]
    %v43 = vld [vmem:[#allocation3 + $0x78] sm:$0xff]
    %v44 = vld [vmem:[#allocation3 + $0x80] sm:$0xff]
    %v45 = vld [vmem:[#allocation3 + $0x88] sm:$0xff]
    %v46 = vld [vmem:[#allocation3 + $0x90] sm:$0xff]
    %v47 = vld [vmem:[#allocation3 + $0x98] sm:$0xff]
    %v48 = vld [vmem:[#allocation3 + $0xa0] sm:$0xff]
    %v49 = vld [vmem:[#allocation3 + $0xa8] sm:$0xff]
    %v50 = vld [vmem:[#allocation3 + $0xb0] sm:$0xff]
    %v51 = vld [vmem:[#allocation3 + $0xb8] sm:$0xff]
    %v52 = vld [vmem:[#allocation3 + $0xc0] sm:$0xff]
    %v53 = vld [vmem:[#allocation3 + $0xc8] sm:$0xff]
    %v54 = vld [vmem:[#allocation3 + $0xd0] sm:$0xff]
    %v55 = vld [vmem:[#allocation3 + $0xd8] sm:$0xff]
    %v56 = vld [vmem:[#allocation3 + $0xe0] sm:$0xff]
    %v57 = vld [vmem:[#allocation3 + $0xe8] sm:$0xff]
    %v58 = vld [vmem:[#allocation3 + $0xf0] sm:$0xff]
    %v59 = vld [vmem:[#allocation3 + $0xf8] sm:$0xff]
    %v60 = vstv %s27
    %v61 = vmul.f32 %v60, %v28
    %v62 = vmul.f32 %v60, %v29
    %v63 = vmul.f32 %v60, %v30
    %v64 = vmul.f32 %v60, %v31
    %v65 = vmul.f32 %v60, %v32
    %v66 = vmul.f32 %v60, %v33
    %v67 = vmul.f32 %v60, %v34
    %v68 = vmul.f32 %v60, %v35
    %v69 = vmul.f32 %v60, %v36
    %v70 = vmul.f32 %v60, %v37
    %v71 = vmul.f32 %v60, %v38
    %v72 = vmul.f32 %v60, %v39
    %v73 = vmul.f32 %v60, %v40
    %v74 = vmul.f32 %v60, %v41
    %v75 = vmul.f32 %v60, %v42
    %v76 = vmul.f32 %v60, %v43
    %v77 = vmul.f32 %v60, %v44
    %v78 = vmul.f32 %v60, %v45
    %v79 = vmul.f32 %v60, %v46
    %v80 = vmul.f32 %v60, %v47
    %v81 = vmul.f32 %v60, %v48
    %v82 = vmul.f32 %v60, %v49
    %v83 = vmul.f32 %v60, %v50
    %v84 = vmul.f32 %v60, %v51
    %v85 = vmul.f32 %v60, %v52
    %v86 = vmul.f32 %v60, %v53
    %v87 = vmul.f32 %v60, %v54
    %v88 = vmul.f32 %v60, %v55
    %v89 = vmul.f32 %v60, %v56
    %v90 = vmul.f32 %v60, %v57
    %v91 = vmul.f32 %v60, %v58
    %v92 = vmul.f32 %v60, %v59
    %93 = vst [vmem:[#allocation6] sm:$0xff] %v61
    %94 = vst [vmem:[#allocation6 + $0x8] sm:$0xff] %v62
    %95 = vst [vmem:[#allocation6 + $0x10] sm:$0xff] %v63
    %96 = vst [vmem:[#allocation6 + $0x18] sm:$0xff] %v64
    %97 = vst [vmem:[#allocation6 + $0x20] sm:$0xff] %v65
    %98 = vst [vmem:[#allocation6 + $0x28] sm:$0xff] %v66
    %99 = vst [vmem:[#allocation6 + $0x30] sm:$0xff] %v67
    %100 = vst [vmem:[#allocation6 + $0x38] sm:$0xff] %v68
    %101 = vst [vmem:[#allocation6 + $0x40] sm:$0xff] %v69
    %102 = vst [vmem:[#allocation6 + $0x48] sm:$0xff] %v70
    %103 = vst [vmem:[#allocation6 + $0x50] sm:$0xff] %v71
    %104 = vst [vmem:[#allocation6 + $0x58] sm:$0xff] %v72
    %105 = vst [vmem:[#allocation6 + $0x60] sm:$0xff] %v73
    %106 = vst [vmem:[#allocation6 + $0x68] sm:$0xff] %v74
    %107 = vst [vmem:[#allocation6 + $0x70] sm:$0xff] %v75
    %108 = vst [vmem:[#allocation6 + $0x78] sm:$0xff] %v76
    %109 = vst [vmem:[#allocation6 + $0x80] sm:$0xff] %v77
    %110 = vst [vmem:[#allocation6 + $0x88] sm:$0xff] %v78
    %111 = vst [vmem:[#allocation6 + $0x90] sm:$0xff] %v79
    %112 = vst [vmem:[#allocation6 + $0x98] sm:$0xff] %v80
    %113 = vst [vmem:[#allocation6 + $0xa0] sm:$0xff] %v81
    %114 = vst [vmem:[#allocation6 + $0xa8] sm:$0xff] %v82
    %115 = vst [vmem:[#allocation6 + $0xb0] sm:$0xff] %v83
    %116 = vst [vmem:[#allocation6 + $0xb8] sm:$0xff] %v84
    %117 = vst [vmem:[#allocation6 + $0xc0] sm:$0xff] %v85
    %118 = vst [vmem:[#allocation6 + $0xc8] sm:$0xff] %v86
    %119 = vst [vmem:[#allocation6 + $0xd0] sm:$0xff] %v87
    %120 = vst [vmem:[#allocation6 + $0xd8] sm:$0xff] %v88
    %121 = vst [vmem:[#allocation6 + $0xe0] sm:$0xff] %v89
    %122 = vst [vmem:[#allocation6 + $0xe8] sm:$0xff] %v90
    %123 = vst [vmem:[#allocation6 + $0xf0] sm:$0xff] %v91
    %124 = vst [vmem:[#allocation6 + $0xf8] sm:$0xff] %v92
    // Predicated region
    $region14: #{tpu_custom_call.1} parent=1 // pred_check
      _
    $region15: #{tpu_custom_call.1} parent=1 // pred_check_branch
      %126 = sbr.rel (0) target = $region17
    $region16: #{tpu_custom_call.1} parent=1 // pred_region
      %s128 = ssub.s32 4096, 4096
      %129 = vsyncadd [#allocation5], %s128
      %s130 = sshll.u32 [#allocation6], 4
      %s131 = int_to_ptr.vmem [resolvable:$true] %s130
      %136 = dma.vmem_to_hbm [thread:$0]  %s131, 4096, %s2, [#allocation5], 1024, 1024, 64
    $region17: #{tpu_custom_call.1} parent=1 // pred_fallthru
      _
    // Predicated region
    $region18: #{tpu_custom_call.1} parent=1 // pred_check
      _
    $region19: #{tpu_custom_call.1} parent=1 // pred_check_branch
      %138 = sbr.rel (0) target = $region21
    $region20: #{tpu_custom_call.1} parent=1 // pred_region
      %139 = dma.done [#allocation5], 4096
    $region21: #{tpu_custom_call.1} parent=1 // pred_fallthru
      _
    %140 = vsyncpa [#allocation4], 1
    %141 = vsyncpa [#allocation5], 1

</llo_original>
